<compile_context>
chip_gen: v5e
topology: v5e:2x2
jax: 0.10.0
libtpu: 0.0.40
codegen_flags: <defaults>
</compile_context>

<pallas_src>
import math

import jax
import jax.numpy as jnp
from jax import lax
from jax.experimental import pallas as pl
from jax.experimental.pallas import tpu as pltpu


def _round_up(x: int, m: int) -> int:
    return ((x + m - 1) // m) * m


def _tile_bytes(rows: int, cols: int, dtype) -> int:
    """VMEM footprint of one [rows, cols] tile incl. sublane/lane padding."""
    bpe = jnp.dtype(dtype).itemsize
    sub = 8 * max(1, 4 // bpe)          # f32 -> 8, bf16 -> 16, int8 -> 32 sublane packing
    return _round_up(max(rows, 1), sub) * _round_up(max(cols, 1), 128) * bpe


def _vmem_budget_bytes() -> int:
    """~70% of physical VMEM (v5e/v6e: ~90 MiB, v7x: ~44 MiB); safe fallback 40 MiB."""
    try:
        info = pltpu.get_tpu_info()
        cap = getattr(info, "vmem_capacity_bytes", None)
        if cap:
            return int(cap * 0.70)
    except Exception:
        pass
    return 40 * 1024 * 1024


def _make_lora_kernel(scaling: float, compute_dtype):
    def kernel(x_ref, a_ref, b_ref, o_ref):
        # x_ref: [TM, in] (native dtype)   a_ref: [r, in]   b_ref: [r, T_OUT]   o_ref: [TM, T_OUT]
        x = x_ref[...].astype(compute_dtype)                   # in-kernel cast (free on VPU)
        xa = lax.dot_general(
            x, a_ref[...],
            dimension_numbers=(((1,), (1,)), ((), ())),        # x @ A^T  -> [TM, r]
            preferred_element_type=jnp.float32)
        xa = (xa * scaling).astype(compute_dtype)              # scale tiny [TM, r] intermediate
        y = lax.dot_general(
            xa, b_ref[...],
            dimension_numbers=(((1,), (0,)), ((), ())),        # (xa) @ B^T  (B pre-transposed)
            preferred_element_type=jnp.float32)
        o_ref[...] = y.astype(o_ref.dtype)
    return kernel


def lora_forward(x, lora_A_w, lora_B_w, alpha, r, *,
                 block_m: int = 1024, compute_dtype=jnp.bfloat16, out_dtype=None):
    """
    x:        [batch, seq, in_features]  (or [M, in_features]), any float dtype
    lora_A_w: [r, in_features]   (torch nn.Linear weight layout)
    lora_B_w: [out_features, r]  (torch nn.Linear weight layout)
    returns   [batch, seq, out_features] in out_dtype (default: x.dtype)
    """
    if compute_dtype is None:
        compute_dtype = x.dtype
    if out_dtype is None:
        out_dtype = x.dtype
    scaling = float(alpha) / float(r)

    orig_shape = x.shape
    in_features = orig_shape[-1]
    out_features = lora_B_w.shape[0]
    assert lora_A_w.shape == (r, in_features)
    assert lora_B_w.shape == (out_features, r)

    x2d = x.reshape(-1, in_features)            # no pad, no cast: DMA'd in native dtype
    M = x2d.shape[0]

    # Weights: tiny one-time cast; B transposed once to [r, out] (lane-dense, canonical dot).
    a_w = lora_A_w.astype(compute_dtype)        # [r, in]
    bt_w = lora_B_w.T.astype(compute_dtype)     # [r, out]

    budget = _vmem_budget_bytes()

    def vmem_need(tm, t_out):
        need = 0
        need += 2 * _tile_bytes(tm, in_features, x2d.dtype)      # double-buffered x tiles
        need += 2 * _tile_bytes(tm, t_out, out_dtype)            # double-buffered y tiles
        need += 2 * _tile_bytes(r, in_features, compute_dtype)   # resident A (2 buffers alloc'd)
        need += 2 * _tile_bytes(r, t_out, compute_dtype)         # resident B^T
        need += _tile_bytes(tm, in_features, compute_dtype)      # in-kernel cast of x
        need += _tile_bytes(tm, t_out, jnp.float32)              # f32 result before output cast
        return need

    # ---- M tile: at most block_m rows, multiple of 8, keep >=16 when possible ----
    tm = max(8, min(_round_up(block_m, 8), _round_up(M, 8)))

    # ---- OUT tile: full by default; split for megacore when there is a single M tile ----
    out_tileable = (out_features % 128 == 0) and (out_features >= 256)
    t_out = out_features
    if out_tileable and -(-M // tm) == 1:
        t_out = max(128, _round_up(out_features // 2, 128))      # give both v7x TCs work

    # ---- VMEM fit: tile out first (keeps TM large), then shrink TM ----
    while vmem_need(tm, t_out) > budget and out_tileable and t_out > 128:
        t_out = max(128, _round_up(t_out // 2, 128))
    while vmem_need(tm, t_out) > budget and tm > 8:
        new_tm = tm // 2
        new_tm = _round_up(new_tm, 128) if new_tm >= 128 else _round_up(new_tm, 8)
        if new_tm >= tm:
            break
        tm = max(8, new_tm)

    num_m = pl.cdiv(M, tm)
    num_out = pl.cdiv(out_features, t_out)
    kernel = _make_lora_kernel(scaling, compute_dtype)

    bpe_x = jnp.dtype(x2d.dtype).itemsize
    bpe_o = jnp.dtype(out_dtype).itemsize
    bpe_c = jnp.dtype(compute_dtype).itemsize
    cost = pl.CostEstimate(
        flops=2 * M * r * (in_features + out_features),
        transcendentals=0,
        bytes_accessed=(M * in_features * bpe_x
                        + M * out_features * bpe_o
                        + r * (in_features + out_features) * bpe_c),
    )

    out = pl.pallas_call(
        kernel,
        out_shape=jax.ShapeDtypeStruct((M, out_features), out_dtype),
        grid_spec=pltpu.PrefetchScalarGridSpec(
            num_scalar_prefetch=0,
            grid=(num_m, num_out),                               # out axis innermost: x tile
            in_specs=[                                           # is not re-DMA'd per out step
                pl.BlockSpec((tm, in_features), lambda i, j: (i, 0)),   # x tile (pipelined)
                pl.BlockSpec((r, in_features), lambda i, j: (0, 0)),    # A, VMEM-resident
                pl.BlockSpec((r, t_out), lambda i, j: (0, j)),          # B^T column block
            ],
            out_specs=pl.BlockSpec((tm, t_out), lambda i, j: (i, j)),
        ),
        compiler_params=pltpu.CompilerParams(
            dimension_semantics=("parallel", "parallel"),        # megacore sharding on v7x
            vmem_limit_bytes=max(vmem_need(tm, t_out) + (8 << 20), 32 << 20),
        ),
        cost_estimate=cost,
    )(x2d, a_w, bt_w)

    return out.reshape(*orig_shape[:-1], out_features)


if __name__ == "__main__":
    # Small shapes consistent with the module.
    batch, seq = 2, 8
    in_features, out_features = 32, 64
    r, alpha = 16, 32

    key = jax.random.PRNGKey(0)
    kx, ka, kb, kb2 = jax.random.split(key, 4)

    x = jax.random.normal(kx, (batch, seq, in_features), dtype=jnp.float32)

    # kaiming_uniform_(a=sqrt(5)) on weight [r, in_features]: bound = 1/sqrt(fan_in)
    bound_a = 1.0 / math.sqrt(in_features)
    lora_A_w = jax.random.uniform(ka, (r, in_features), dtype=jnp.float32,
                                  minval=-bound_a, maxval=bound_a)
    # The module initializes lora_B to zeros (forward would be identically 0);
    # use non-zero weights here so the numerics check is meaningful.
    bound_b = 1.0 / math.sqrt(r)
    lora_B_w = jax.random.uniform(kb, (out_features, r), dtype=jnp.float32,
                                  minval=-bound_b, maxval=bound_b)

    # Plain-JAX reference (eval mode: dropout is identity).
    scaling = alpha / r
    y_ref = (x.reshape(-1, in_features) @ lora_A_w.T @ lora_B_w.T) * scaling
    y_ref = y_ref.reshape(batch, seq, out_features)

    # 1) f32 compute path with a tiny block_m so the M-tiled grid (2 steps) is exercised.
    y32 = lora_forward(x, lora_A_w, lora_B_w, alpha, r,
                       block_m=8, compute_dtype=jnp.float32)
    y32 = jax.block_until_ready(y32)
    assert y32.shape == (batch, seq, out_features)
    assert jnp.allclose(y32, y_ref, atol=1e-5, rtol=1e-4)

    # 2) Default fast path: bf16 operands (cast in-kernel), f32 accumulation.
    ybf = lora_forward(x, lora_A_w, lora_B_w, alpha, r)
    ybf = jax.block_until_ready(ybf)
    assert ybf.shape == (batch, seq, out_features)
    assert jnp.allclose(ybf.astype(jnp.float32), y_ref, atol=5e-2, rtol=5e-2)

    # 3) 128-aligned out_features with a single M tile -> exercises the OUT grid axis
    #    (the megacore split heuristic yields 2 out tiles).
    out2 = 256
    lora_B2_w = jax.random.uniform(kb2, (out2, r), dtype=jnp.float32,
                                   minval=-bound_b, maxval=bound_b)
    y2_ref = ((x.reshape(-1, in_features) @ lora_A_w.T @ lora_B2_w.T) * scaling
              ).reshape(batch, seq, out2)
    y2 = lora_forward(x, lora_A_w, lora_B2_w, alpha, r,
                      compute_dtype=jnp.float32)
    y2 = jax.block_until_ready(y2)
    assert y2.shape == (batch, seq, out2)
    assert jnp.allclose(y2, y2_ref, atol=1e-5, rtol=1e-4)

    print("KERNEL_OK")
</pallas_src>

<mosaic_0001>
module attributes {stable_mosaic.version = 11 : i64} {
  func.func @kernel(%arg0: i32, %arg1: i32, %arg2: memref<8x32xf32, #tpu.memory_space<vmem>>, %arg3: memref<16x32xf32, #tpu.memory_space<vmem>>, %arg4: memref<16x64xf32, #tpu.memory_space<vmem>>, %arg5: memref<8x64xf32, #tpu.memory_space<vmem>>) attributes {dimension_semantics = [#tpu.dimension_semantics<parallel>, #tpu.dimension_semantics<parallel>], iteration_bounds = array<i64: 2, 1>, scalar_prefetch = 0 : i64, scratch_operands = 0 : i64, tpu.core_type = #tpu.core_type<tc>, window_params = [{transform_indices = @transform_0, window_bounds = array<i64: 8, 32>}, {pipeline_mode = #tpu.pipeline_mode<synchronous>, transform_indices = @transform_1, window_bounds = array<i64: 16, 32>}, {transform_indices = @transform_2, window_bounds = array<i64: 16, 64>}, {transform_indices = @transform_3, window_bounds = array<i64: 8, 64>}]} {
    %c0 = arith.constant 0 : index
    %c0_0 = arith.constant 0 : index
    %0 = vector.load %arg2[%c0, %c0_0] : memref<8x32xf32, #tpu.memory_space<vmem>>, vector<8x32xf32>
    %c0_1 = arith.constant 0 : index
    %c0_2 = arith.constant 0 : index
    %1 = vector.load %arg3[%c0_1, %c0_2] : memref<16x32xf32, #tpu.memory_space<vmem>>, vector<16x32xf32>
    %cst = arith.constant dense<0.000000e+00> : vector<8x16xf32>
    %2 = tpu.matmul %0, %1, %cst {dimension_numbers = #tpu.dot_dimension_numbers<[1], [1], [0], [0], [0, 0, 1, 0], [], []>} : vector<8x32xf32>, vector<16x32xf32>, vector<8x16xf32> -> vector<8x16xf32>
    %cst_3 = arith.constant 2.000000e+00 : f32
    %3 = vector.broadcast %cst_3 : f32 to vector<8x16xf32>
    %4 = arith.mulf %2, %3 : vector<8x16xf32>
    %c0_4 = arith.constant 0 : index
    %c0_5 = arith.constant 0 : index
    %5 = vector.load %arg4[%c0_4, %c0_5] : memref<16x64xf32, #tpu.memory_space<vmem>>, vector<16x64xf32>
    %cst_6 = arith.constant dense<0.000000e+00> : vector<8x64xf32>
    %6 = tpu.matmul %4, %5, %cst_6 {dimension_numbers = #tpu.dot_dimension_numbers<[1], [0], [0], [1], [0, 0, 1, 1], [], []>} : vector<8x16xf32>, vector<16x64xf32>, vector<8x64xf32> -> vector<8x64xf32>
    %c0_7 = arith.constant 0 : index
    %c0_8 = arith.constant 0 : index
    %7 = vector.load %arg5[%c0_7, %c0_8] : memref<8x64xf32, #tpu.memory_space<vmem>>, vector<8x64xf32>
    tpu.vector_store %arg5[%c0_7, %c0_8], %6 {strides = array<i32>} : memref<8x64xf32, #tpu.memory_space<vmem>>, vector<8x64xf32>,
    return
  }
  func.func @transform_0(%arg0: i32, %arg1: i32) -> (i32, i32) {
    %c0_i32 = arith.constant 0 : i32
    %c0_i32_0 = arith.constant 0 : i32
    return %arg0, %c0_i32 : i32, i32
  }
  func.func @transform_1(%arg0: i32, %arg1: i32) -> (i32, i32) {
    %c0_i32 = arith.constant 0 : i32
    %c0_i32_0 = arith.constant 0 : i32
    %c0_i32_1 = arith.constant 0 : i32
    return %c0_i32, %c0_i32_0 : i32, i32
  }
  func.func @transform_2(%arg0: i32, %arg1: i32) -> (i32, i32) {
    %c0_i32 = arith.constant 0 : i32
    %c0_i32_0 = arith.constant 0 : i32
    return %c0_i32, %arg1 : i32, i32
  }
  func.func @transform_3(%arg0: i32, %arg1: i32) -> (i32, i32) {
    %c0_i32 = arith.constant 0 : i32
    return %arg0, %arg1 : i32, i32
  }
}

</mosaic_0001>

<llo_original>
// kernel: tpu_custom_call.1
$region0: #{tpu_custom_call.1}
  #allocation0 [shape = 'u32[]', space=smem, size = 0x4, offset = 0x4, fixed_abs, tag = 'smem constant byte address 0x4 - core index']
  #allocation1 [shape = 'u32[72,128]{1,0:T(1,128)}', space=vmem, size = 0x9000, scoped, tag = 'internal scratch']
  %s0 = inlined_call_operand.hbm [shape: f32[16,32], index: 0, kind: input, shape index: {}]
  %s1 = inlined_call_operand.hbm [shape: f32[16,32], index: 1, kind: input, shape index: {}]
  %s2 = inlined_call_operand.hbm [shape: f32[16,64], index: 2, kind: input, shape index: {}]
  %s3 = inlined_call_operand.hbm [shape: f32[16,64], index: 3, kind: output, shape index: {}]
  %s4 = sld [smem:[#allocation0]]
  $region57: #{tpu_custom_call.1} parent=0
    _
  %s6 = ssub.s32 1, %s4
  %s7 = scalar_select 0, %s6, %s4
  $region1: #{tpu_custom_call.1} parent=0
    #allocation2 [shape = 'u8[8192]{0}', space=vmem, size = 0x2000, scoped, tag = 'input window, operand 0']
    #allocation3 [shape = 's32[2]{0}', space=sflag, size = 0x8, scoped, tag = 'scoped memory for tpu_custom_call.1']
    #allocation4 [shape = 's32[2]{0}', space=sflag, size = 0x8, scoped, tag = 'scoped memory for tpu_custom_call.1']
    #allocation5 [shape = 'u8[8192]{0}', space=vmem, size = 0x2000, scoped, tag = 'input window, operand 1, single buffered']
    #allocation6 [shape = 's32[1]{0}', space=sflag, size = 0x4, scoped, tag = 'scoped memory for tpu_custom_call.1']
    #allocation7 [shape = 'u8[8192]{0}', space=vmem, size = 0x2000, scoped, tag = 'input window, operand 2, single buffered']
    #allocation8 [shape = 'u8[8192]{0}', space=vmem, size = 0x2000, scoped, tag = 'output window, operand 0']
    %8 = vsyncpa [#allocation3], 0
    %s9 = scalar_lea.sflag [#allocation3], 1
    %10 = vsyncpa %s9, 0
    %11 = vsyncpa [#allocation6], 0
    %12 = vsyncpa [#allocation4], 0
    %s13 = scalar_lea.sflag [#allocation4], 1
    %14 = vsyncpa %s13, 0
    loop: start=0, step=1, limit=4
    $region2: #{tpu_custom_call.1} parent=1 // loop_pre_header
      _
    $region3: #{tpu_custom_call.1} parent=1 // loop_header
      %s16 = sphi 0, %s20
      %p17 = scmp.ge.s32.totalorder %s16, 4
      %s23 = sphi 0, %s35
      %s24 = sphi 0, %s31
      %s25 = sphi 0, %s23
      %s26 = sphi 0, %s24
      %s27 = sphi 0, %s25
      %s28 = sphi 0, %s26
      %s38 = sphi 0, %s40
      %s41 = sphi 0, %s38
      %s42 = sphi 0, %s41
      %s58 = sphi 0, %s42
      %s62 = sphi 0, %s62
      %s64 = sphi 0, %s62
      %s65 = sphi 0, %s64
      %s79 = sphi 0, %s65
      %s85 = sphi 0, %s87
      %s88 = sphi 0, %s85
      %s89 = sphi 0, %s88
      %s105 = sphi 0, %s89
      %s113 = sphi 0, %s115
      %s116 = sphi 0, %s113
      %s117 = sphi 0, %s116
      %s133 = sphi 0, %s117
    $region4: #{tpu_custom_call.1} parent=1 // loop_header_branch
      %19 = sbr.rel (%p17) target = $region8
    $region5: #{tpu_custom_call.1} parent=1 // loop_body
      %s21 = ssub.s32 %s16, 1
      %s22 = ssub.s32 %s16, 2
      %s29 = sadd.s32 1, %s24
      %p30 = scmp.ge.s32.totalorder %s29, 1
      %s31 = scalar_select %p30, 0, %s29
      %s32 = sadd.s32 1, %s23
      %s33 = scalar_select %p30, %s32, %s23
      %p34 = scmp.ge.s32.totalorder %s33, 2
      %s35 = scalar_select %p34, 0, %s33
      %s36 = ssub.s32 %s23, %s35
      %p37 = scmp.eq.s32.totalorder %s36, 0
      %s39 = sadd.s32 %s38, 1
      %s40 = scalar_select %p37, %s38, %s39
      %p43 = pneg %p37
      %p44 = scmp.eq.s32.totalorder %s16, 1
      %p45 = por %p43, %p44
      %p46 = scmp.ne.s32.totalorder %s38, %s41
      %p47 = scmp.eq.s32.totalorder %s16, 0
      %p48 = por %p46, %p47
      %p49 = scmp.ne.s32.totalorder %s38, %s41
      %p50 = scmp.eq.s32.totalorder %s21, 1
      %p51 = por %p49, %p50
      %p52 = scmp.ne.s32.totalorder %s41, %s42
      %p53 = scmp.eq.s32.totalorder %s21, 0
      %p54 = por %p52, %p53
      %p55 = scmp.ne.s32.totalorder %s41, %s42
      %p56 = scmp.eq.s32.totalorder %s22, 1
      %p57 = por %p55, %p56
      %p59 = scmp.ne.s32.totalorder %s42, %s58
      %p60 = scmp.eq.s32.totalorder %s22, 0
      %p61 = por %p59, %p60
      %s63 = sadd.s32 %s62, 1
      %p66 = scmp.eq.s32.totalorder %s16, 1
      %p67 = scmp.ne.s32.totalorder %s62, %s64
      %p68 = scmp.eq.s32.totalorder %s16, 0
      %p69 = por %p67, %p68
      %p70 = scmp.ne.s32.totalorder %s62, %s64
      %p71 = scmp.eq.s32.totalorder %s21, 1
      %p72 = por %p70, %p71
      %p73 = scmp.ne.s32.totalorder %s64, %s65
      %p74 = scmp.eq.s32.totalorder %s21, 0
      %p75 = por %p73, %p74
      %p76 = scmp.ne.s32.totalorder %s64, %s65
      %p77 = scmp.eq.s32.totalorder %s22, 1
      %p78 = por %p76, %p77
      %p80 = scmp.ne.s32.totalorder %s65, %s79
      %p81 = scmp.eq.s32.totalorder %s22, 0
      %p82 = por %p80, %p81
      %s83 = ssub.s32 %s24, %s31
      %p84 = scmp.eq.s32.totalorder %s83, 0
      %s86 = sadd.s32 %s85, 1
      %s87 = scalar_select %p84, %s85, %s86
      %p90 = pneg %p84
      %p91 = scmp.eq.s32.totalorder %s16, 1
      %p92 = por %p90, %p91
      %p93 = scmp.ne.s32.totalorder %s85, %s88
      %p94 = scmp.eq.s32.totalorder %s16, 0
      %p95 = por %p93, %p94
      %p96 = scmp.ne.s32.totalorder %s85, %s88
      %p97 = scmp.eq.s32.totalorder %s21, 1
      %p98 = por %p96, %p97
      %p99 = scmp.ne.s32.totalorder %s88, %s89
      %p100 = scmp.eq.s32.totalorder %s21, 0
      %p101 = por %p99, %p100
      %p102 = scmp.ne.s32.totalorder %s88, %s89
      %p103 = scmp.eq.s32.totalorder %s22, 1
      %p104 = por %p102, %p103
      %p106 = scmp.ne.s32.totalorder %s89, %s105
      %p107 = scmp.eq.s32.totalorder %s22, 0
      %p108 = por %p106, %p107
      %s109 = ssub.s32 %s23, %s35
      %s110 = ssub.s32 %s24, %s31
      %s111 = sor.u32 %s109, %s110
      %p112 = scmp.eq.s32.totalorder %s111, 0
      %s114 = sadd.s32 %s113, 1
      %s115 = scalar_select %p112, %s113, %s114
      %p118 = pneg %p112
      %p119 = scmp.eq.s32.totalorder %s16, 1
      %p120 = por %p118, %p119
      %p121 = scmp.ne.s32.totalorder %s113, %s116
      %p122 = scmp.eq.s32.totalorder %s16, 0
      %p123 = por %p121, %p122
      %p124 = scmp.ne.s32.totalorder %s113, %s116
      %p125 = scmp.eq.s32.totalorder %s21, 1
      %p126 = por %p124, %p125
      %p127 = scmp.ne.s32.totalorder %s116, %s117
      %p128 = scmp.eq.s32.totalorder %s21, 0
      %p129 = por %p127, %p128
      %p130 = scmp.ne.s32.totalorder %s116, %s117
      %p131 = scmp.eq.s32.totalorder %s22, 1
      %p132 = por %p130, %p131
      %p134 = scmp.ne.s32.totalorder %s117, %s133
      %p135 = scmp.eq.s32.totalorder %s22, 0
      %p136 = por %p134, %p135
      %p137 = scmp.le.s32.totalorder 1, %s16
      %p138 = scmp.lt.s32.totalorder %s16, 3
      %p139 = pnand %p137, %p138
      %p140 = pneg %p139
      // Predicated region
      $region9: #{tpu_custom_call.1} parent=5 // pred_check
        _
      $region10: #{tpu_custom_call.1} parent=5 // pred_check_branch
        %142 = sbr.rel (%p139) target = $region12
      $region11: #{tpu_custom_call.1} parent=5 // pred_region
        %s143 = ssub.s32 %s16, 1
        // Predicated region
        $region13: #{tpu_custom_call.1} parent=11 // pred_check
          %p144 = pneg %p75
        $region14: #{tpu_custom_call.1} parent=11 // pred_check_branch
          %146 = sbr.rel (%p144) target = $region16
        $region15: #{tpu_custom_call.1} parent=11 // pred_region
          %148 = vsyncadd [#allocation6], 0
          %s149 = sshll.u32 %s1, 4
          %s150 = int_to_ptr.hbm [resolvable:$true] %s149
          %s151 = sshll.u32 [#allocation5], 4
          %s152 = int_to_ptr.vmem [resolvable:$true] %s151
          %157 = dma.hbm_to_vmem [thread:$0]  %s150, 256, %s152, [#allocation6], 128, 128, 8
        $region16: #{tpu_custom_call.1} parent=11 // pred_fallthru
          _
        // Predicated region
        $region17: #{tpu_custom_call.1} parent=11 // pred_check
          %p158 = pneg %p101
        $region18: #{tpu_custom_call.1} parent=11 // pred_check_branch
          %160 = sbr.rel (%p158) target = $region20
        $region19: #{tpu_custom_call.1} parent=11 // pred_region
          %162 = vsyncadd [#allocation6], 0
          %s163 = smul.addr %s26, 8
          %s164 = scalar_lea.hbm %s2, %s163
          %s165 = sshll.u32 %s164, 4
          %s166 = int_to_ptr.hbm [resolvable:$true] %s165
          %s167 = sshll.u32 [#allocation7], 4
          %s168 = int_to_ptr.vmem [resolvable:$true] %s167
          %173 = dma.hbm_to_vmem [thread:$0]  %s166, 256, %s168, [#allocation6], 128, 128, 8
        $region20: #{tpu_custom_call.1} parent=11 // pred_fallthru
          _
      $region12: #{tpu_custom_call.1} parent=5 // pred_fallthru
        _
      %p174 = scmp.lt.s32.totalorder %s16, 2
      // Predicated region
      $region21: #{tpu_custom_call.1} parent=5 // pred_check
        %p175 = pneg %p174
      $region22: #{tpu_custom_call.1} parent=5 // pred_check_branch
        %177 = sbr.rel (%p175) target = $region24
      $region23: #{tpu_custom_call.1} parent=5 // pred_region
        // Predicated region
        $region25: #{tpu_custom_call.1} parent=23 // pred_check
          %p178 = pneg %p48
        $region26: #{tpu_custom_call.1} parent=23 // pred_check_branch
          %180 = sbr.rel (%p178) target = $region28
        $region27: #{tpu_custom_call.1} parent=23 // pred_region
          %s181 = sand.u32 %s38, 1
          %s182 = scalar_lea.sflag [#allocation3], %s181
          %s183 = sand.u32 %s38, 1
          %s184 = smul.addr %s183, 8
          %s185 = scalar_lea.vmem [#allocation2], %s184
          %187 = vsyncadd %s182, 0
          %s188 = smul.addr %s23, 8
          %s189 = scalar_lea.hbm %s0, %s188
          %s191 = sshll.u32 %s189, 4
          %s192 = int_to_ptr.hbm [resolvable:$true] %s191
          %s193 = sshll.u32 %s185, 4
          %s194 = int_to_ptr.vmem [resolvable:$true] %s193
          %196 = dma.hbm_to_vmem [thread:$0]  %s192, 128, %s194, %s182
        $region28: #{tpu_custom_call.1} parent=23 // pred_fallthru
          _
      $region24: #{tpu_custom_call.1} parent=5 // pred_fallthru
        _
      %p197 = scmp.le.s32.totalorder 1, %s16
      %p198 = scmp.lt.s32.totalorder %s16, 3
      %p199 = pnand %p197, %p198
      %p200 = pneg %p199
      // Predicated region
      $region29: #{tpu_custom_call.1} parent=5 // pred_check
        _
      $region30: #{tpu_custom_call.1} parent=5 // pred_check_branch
        %202 = sbr.rel (%p199) target = $region32
      $region31: #{tpu_custom_call.1} parent=5 // pred_region
        %s203 = ssub.s32 %s16, 1
        %s204 = sand.u32 %s41, 1
        %s205 = scalar_lea.sflag [#allocation3], %s204
        %s206 = sand.u32 %s41, 1
        %s207 = smul.addr %s206, 8
        %s208 = scalar_lea.vmem [#allocation2], %s207
        // Predicated region
        $region33: #{tpu_custom_call.1} parent=31 // pred_check
          %p209 = pneg %p54
        $region34: #{tpu_custom_call.1} parent=31 // pred_check_branch
          %211 = sbr.rel (%p209) target = $region36
        $region35: #{tpu_custom_call.1} parent=31 // pred_region
          %213 = dma.done %s205, 128
        $region36: #{tpu_custom_call.1} parent=31 // pred_fallthru
          _
        // Predicated region
        $region37: #{tpu_custom_call.1} parent=31 // pred_check
          %p214 = pneg %p75
        $region38: #{tpu_custom_call.1} parent=31 // pred_check_branch
          %216 = sbr.rel (%p214) target = $region40
        $region39: #{tpu_custom_call.1} parent=31 // pred_region
          %218 = dma.done [#allocation6], 256
        $region40: #{tpu_custom_call.1} parent=31 // pred_fallthru
          _
        // Predicated region
        $region41: #{tpu_custom_call.1} parent=31 // pred_check
          %p219 = pneg %p101
        $region42: #{tpu_custom_call.1} parent=31 // pred_check_branch
          %221 = sbr.rel (%p219) target = $region44
        $region43: #{tpu_custom_call.1} parent=31 // pred_region
          %223 = dma.done [#allocation6], 256
        $region44: #{tpu_custom_call.1} parent=31 // pred_fallthru
          _
        %s224 = sand.u32 %s41, 1
        %s225 = scalar_lea.sflag [#allocation3], %s224
        %s226 = sand.u32 %s41, 1
        %s227 = smul.addr %s226, 8
        %s228 = scalar_lea.vmem [#allocation2], %s227
        %p229 = pneg %p54
        %p230 = pneg %p51
        %p231 = pneg %p75
        %p232 = pneg %p72
        %p233 = pneg %p101
        %p234 = pneg %p98
        %p235 = pneg %p129
        %p236 = pneg %p126
        %s237 = sand.u32 %s116, 1
        %s238 = scalar_lea.sflag [#allocation4], %s237
        %s239 = sand.u32 %s116, 1
        %s240 = smul.addr %s239, 8
        %s241 = scalar_lea.vmem [#allocation8], %s240
        %v242 = vld [vmem:[%s208] sm:$0xff]
        %v243 = vld [vmem:[#allocation5] sm:$0xff]
        %v244 = vld [vmem:[#allocation5 + $0x8] sm:$0xff]
        %vm245 = vcmask 261120
        %v247 = vsel %vm245, %v242, 0
        %v250 = vsel %vm245, %v243, 0
        %v253 = vsel %vm245, %v244, 0
        %255 = vmatpush.xpose.msra.mxu0 0.0
        %256 = vmatpush.xpose.msra.mxu0 0.0
        %257 = vmatpush.xpose.msra.mxu0 0.0
        %258 = vmatpush.xpose.msra.mxu0 0.0
        %259 = vmatpush.xpose.msra.mxu0 0.0
        %260 = vmatpush.xpose.msra.mxu0 0.0
        %261 = vmatpush.xpose.msra.mxu0 0.0
        %262 = vmatpush.xpose.msra.mxu0 0.0
        %263 = vmatpush.xpose.msra.mxu0 0.0
        %264 = vmatpush.xpose.msra.mxu0 0.0
        %265 = vmatpush.xpose.msra.mxu0 0.0
        %266 = vmatpush.xpose.msra.mxu0 0.0
        %267 = vmatpush.xpose.msra.mxu0 0.0
        %268 = vmatpush.xpose.msra.mxu0 0.0
        %269 = vmatpush.xpose.msra.mxu0 %v253
        %270 = vmatpush.xpose.msra.mxu0 %v250
        %271 = vmatmul.f32.gmra.mxu0 %v247
        %v272 = vpop.f32.mrf.mxu0
        %v273 = vadd.f32 0.0, %v272
        %274 = vdwg.mxu0
        %v275 = vmul.f32 %v273, 2.0
        %v276 = vld [vmem:[#allocation7] sm:$0xff]
        %v277 = vld [vmem:[#allocation7 + $0x8] sm:$0xff]
        %vm278 = vcmask 130048
        %v280 = vsel %vm278, %v275, 0
        %282 = vmatpush.msra.mxu0 0.0
        %283 = vmatpush.msra.mxu0 0.0
        %284 = vmatpush.msra.mxu0 0.0
        %285 = vmatpush.msra.mxu0 0.0
        %286 = vmatpush.msra.mxu0 0.0
        %287 = vmatpush.msra.mxu0 0.0
        %288 = vmatpush.msra.mxu0 0.0
        %289 = vmatpush.msra.mxu0 0.0
        %290 = vmatpush.msra.mxu0 0.0
        %291 = vmatpush.msra.mxu0 0.0
        %292 = vmatpush.msra.mxu0 0.0
        %293 = vmatpush.msra.mxu0 0.0
        %294 = vmatpush.msra.mxu0 0.0
        %295 = vmatpush.msra.mxu0 0.0
        %296 = vmatpush.msra.mxu0 %v277
        %297 = vmatpush.msra.mxu0 %v276
        %298 = vmatmul.f32.gmra.mxu0 %v280
        %v299 = vpop.f32.mrf.mxu0
        %v300 = vadd.f32 0.0, %v299
        %301 = vdwg.mxu0
        %vm302 = vcmask 523264
        %303 = vst.msk [vmem:[%s241] sm:$0xff] %vm302, %v300
        %s304 = sand.u32 %s116, 1
        %s305 = scalar_lea.sflag [#allocation4], %s304
        %s306 = sand.u32 %s116, 1
        %s307 = smul.addr %s306, 8
        %s308 = scalar_lea.vmem [#allocation8], %s307
        // Predicated region
        $region45: #{tpu_custom_call.1} parent=31 // pred_check
          %p309 = pneg %p126
        $region46: #{tpu_custom_call.1} parent=31 // pred_check_branch
          %311 = sbr.rel (%p309) target = $region48
        $region47: #{tpu_custom_call.1} parent=31 // pred_region
          %313 = vsyncadd %s305, 0
          %s314 = sadd.s32 %s26, %s25
          %s315 = smul.addr %s314, 8
          %s316 = scalar_lea.hbm %s3, %s315
          %s318 = sshll.u32 %s308, 4
          %s319 = int_to_ptr.vmem [resolvable:$true] %s318
          %s320 = sshll.u32 %s316, 4
          %s321 = int_to_ptr.hbm [resolvable:$true] %s320
          %323 = dma.vmem_to_hbm [thread:$0]  %s319, 128, %s321, %s305
        $region48: #{tpu_custom_call.1} parent=31 // pred_fallthru
          _
      $region32: #{tpu_custom_call.1} parent=5 // pred_fallthru
        _
      %p324 = scmp.le.s32.totalorder 2, %s16
      // Predicated region
      $region49: #{tpu_custom_call.1} parent=5 // pred_check
        %p325 = pneg %p324
      $region50: #{tpu_custom_call.1} parent=5 // pred_check_branch
        %327 = sbr.rel (%p325) target = $region52
      $region51: #{tpu_custom_call.1} parent=5 // pred_region
        %s328 = ssub.s32 %s16, 2
        // Predicated region
        $region53: #{tpu_custom_call.1} parent=51 // pred_check
          %p329 = pneg %p132
        $region54: #{tpu_custom_call.1} parent=51 // pred_check_branch
          %331 = sbr.rel (%p329) target = $region56
        $region55: #{tpu_custom_call.1} parent=51 // pred_region
          %s332 = sand.u32 %s117, 1
          %s333 = scalar_lea.sflag [#allocation4], %s332
          %s334 = sand.u32 %s117, 1
          %s335 = smul.addr %s334, 8
          %s336 = scalar_lea.vmem [#allocation8], %s335
          %338 = dma.done %s333, 128
        $region56: #{tpu_custom_call.1} parent=51 // pred_fallthru
          _
      $region52: #{tpu_custom_call.1} parent=5 // pred_fallthru
        _
    $region6: #{tpu_custom_call.1} parent=1 // loop_footer
      %s20 = sadd.s32 1, %s16
    $region7: #{tpu_custom_call.1} parent=1 // loop_footer_branch
      %15 = sbr.rel target = $region3
    $region8: #{tpu_custom_call.1} parent=1 // loop_exit
      _
    %339 = vsyncpa [#allocation3], 1
    %s340 = scalar_lea.sflag [#allocation3], 1
    %341 = vsyncpa %s340, 1
    %342 = vsyncpa [#allocation6], 1
    %343 = vsyncpa [#allocation4], 1
    %s344 = scalar_lea.sflag [#allocation4], 1
    %345 = vsyncpa %s344, 1

</llo_original>
